<compile_context>
chip_gen: v5e
topology: v5e:2x2
jax: 0.10.0
libtpu: 0.0.40
codegen_flags: <defaults>
</compile_context>

<pallas_src>
import functools

import jax
import jax.numpy as jnp
from jax.experimental import pallas as pl
from jax.experimental.pallas import tpu as pltpu

HID1 = 128               # first hidden width (per head)
HID2 = 64                # second hidden width (per head)
BIG_TILE = 2048          # max rows per grid step on the batch-tiled path
SPLIT_THRESHOLD = 1024   # B <= this -> single full-array block (one grid step)


def _round_up(x, m):
    return ((x + m - 1) // m) * m


def _cdiv(a, b):
    return -(-a // b)


def _actor_critic_kernel(state_ref, slab_a_ref, slab_b_ref, out_ref, *,
                         sd, sd_pad, out_w):
    """Fused actor+critic forward for one batch tile.

    state_ref : (tb, sd)                         f32
    slab_a_ref: (sd_pad + 8, 2*HID1)             f32  rows [0:sd]=W1, row sd_pad=b1
    slab_b_ref: (2*HID1 + 2*HID2 + 16, 2*HID2)   f32  rows [0:256]=W2 (block-diag),
                rows [256:384]=W3 (block-diag, col-padded), row 384=b2, row 392=b3
    out_ref   : (tb, out_w)                      f32  lanes [0:A]=mean logits,
                                                      lane A=value
    """
    x = state_ref[...]                                             # (tb, sd)

    # ---- carve parameter slabs with static, sublane-aligned slices ----
    w1 = slab_a_ref[0:sd_pad, :]                                   # (sd_pad, 256)
    if sd < sd_pad:
        w1 = w1[:sd, :]                                            # padded rows are zero
    b1 = slab_a_ref[sd_pad:sd_pad + 1, :]                          # (1, 256)

    w2 = slab_b_ref[0:2 * HID1, :]                                 # (256, 128)
    w3 = slab_b_ref[2 * HID1:2 * HID1 + 2 * HID2, :]               # (128, 128)
    rb = 2 * HID1 + 2 * HID2
    b2 = slab_b_ref[rb:rb + 1, :]                                  # (1, 128)
    b3 = slab_b_ref[rb + 8:rb + 9, :]                              # (1, 128)

    # ---- 3 fused matmuls (actor lanes + critic lanes in one pass) ----
    h1 = jnp.tanh(jnp.dot(x, w1, preferred_element_type=jnp.float32) + b1)
    h2 = jnp.tanh(jnp.dot(h1, w2, preferred_element_type=jnp.float32) + b2)
    z3 = jnp.dot(h2, w3, preferred_element_type=jnp.float32) + b3  # (tb, 128)

    # Store only the useful lanes; the final actor tanh is applied in the
    # wrapper on the tiny (B, action_dim) slice instead of all 128 lanes here.
    if out_w < z3.shape[1]:
        z3 = z3[:, :out_w]
    out_ref[...] = z3.astype(out_ref.dtype)


@functools.partial(jax.jit, static_argnames=("action_dim",))
def actor_critic_forward(state, slab_a, slab_b, action_dim):
    """Returns (mean, cov_mat, value), mirroring ActorCritic.forward."""
    B, sd = state.shape
    sd_pad = slab_a.shape[0] - 8
    out_w = min(2 * HID2, _round_up(action_dim + 1, 8))

    state = state.astype(jnp.float32)

    # Batch tiling:
    #  * small B  -> single full-array block (no padding, no extra grid steps).
    #  * large B  -> >= 2 tiles of <= BIG_TILE rows so v7x's two TensorCores
    #    both get work and the ~0.35us per-step overhead is amortized.
    if B <= SPLIT_THRESHOLD:
        tb, grid_b, b_pad = B, 1, B
    else:
        grid_b = max(2, _cdiv(B, BIG_TILE))
        tb = _round_up(_cdiv(B, grid_b), 8)
        b_pad = tb * grid_b
    state_p = state if b_pad == B else jnp.pad(state, ((0, b_pad - B), (0, 0)))

    kernel = functools.partial(
        _actor_critic_kernel, sd=sd, sd_pad=sd_pad, out_w=out_w)

    out = pl.pallas_call(
        kernel,
        out_shape=jax.ShapeDtypeStruct((b_pad, out_w), jnp.float32),
        grid=(grid_b,),
        in_specs=[
            pl.BlockSpec((tb, sd), lambda i: (i, 0)),       # state tile
            pl.BlockSpec(slab_a.shape, lambda i: (0, 0)),   # weights stay resident
            pl.BlockSpec(slab_b.shape, lambda i: (0, 0)),
        ],
        out_specs=pl.BlockSpec((tb, out_w), lambda i: (i, 0)),
        compiler_params=pltpu.CompilerParams(
            dimension_semantics=("parallel",),              # shards over TCs on v7x
        ),
    )(state_p, slab_a, slab_b)

    # Final actor tanh on the sliced mean (25x fewer elements than in-kernel);
    # tanh is already in [-1, 1] so the torch clamp is a no-op.
    mean = jnp.tanh(out[:B, :action_dim])
    value = out[:B, action_dim:action_dim + 1]

    # Constant covariance matrix diag(0.5) (plain-JAX glue, matches the module).
    cov_mat = jnp.diag(jnp.full((action_dim,), 0.5, dtype=jnp.float32))
    return mean, cov_mat, value


# --------------------------- parameter handling ---------------------------

def _orthogonal(key, rows, cols, gain=0.01, dtype=jnp.float32):
    """Deterministic orthogonal init (torch.nn.init.orthogonal_ semantics)."""
    n, m = (rows, cols) if rows >= cols else (cols, rows)
    a = jax.random.normal(key, (n, m), dtype=jnp.float32)
    q, r = jnp.linalg.qr(a)
    q = q * jnp.sign(jnp.diagonal(r))
    if rows < cols:
        q = q.T
    return (gain * q[:rows, :cols]).astype(dtype)


def init_params(key, state_dim, action_dim):
    """Per-layer weights stored as (in, out), biases as (out,), zero biases."""
    keys = jax.random.split(key, 6)

    def lin(k, in_f, out_f):
        w = _orthogonal(k, out_f, in_f).T          # (in, out)
        b = jnp.zeros((out_f,), dtype=jnp.float32)
        return w, b

    wa1, ba1 = lin(keys[0], state_dim, HID1)
    wa2, ba2 = lin(keys[1], HID1, HID2)
    wa3, ba3 = lin(keys[2], HID2, action_dim)
    wc1, bc1 = lin(keys[3], state_dim, HID1)
    wc2, bc2 = lin(keys[4], HID1, HID2)
    wc3, bc3 = lin(keys[5], HID2, 1)
    return dict(
        wa1=wa1, ba1=ba1, wa2=wa2, ba2=ba2, wa3=wa3, ba3=ba3,
        wc1=wc1, bc1=bc1, wc2=wc2, bc2=bc2, wc3=wc3, bc3=bc3,
    )


def pack_params(params, state_dim, action_dim, dtype=jnp.float32):
    """Pack actor+critic params into two lane-padded slabs (done once)."""
    assert action_dim + 1 <= 2 * HID2, "action_dim too large for 128-lane layer-3"
    sd_pad = _round_up(state_dim, 8)

    # slab A: 256-lane wide -> W1 = [wa1 | wc1] plus an 8-row bias block.
    slab_a = jnp.zeros((sd_pad + 8, 2 * HID1), dtype=dtype)
    w1 = jnp.concatenate([params["wa1"], params["wc1"]], axis=1)   # (sd, 256)
    slab_a = slab_a.at[:state_dim, :].set(w1.astype(dtype))
    b1 = jnp.concatenate([params["ba1"], params["bc1"]], axis=0)   # (256,)
    slab_a = slab_a.at[sd_pad, :].set(b1.astype(dtype))

    # slab B: 128-lane wide -> block-diag W2, col-padded block-diag W3, then
    # b2 and b3 each in their own sublane-aligned 8-row block.
    slab_b = jnp.zeros((2 * HID1 + 2 * HID2 + 16, 2 * HID2), dtype=dtype)
    slab_b = slab_b.at[0:HID1, 0:HID2].set(params["wa2"].astype(dtype))
    slab_b = slab_b.at[HID1:2 * HID1, HID2:2 * HID2].set(params["wc2"].astype(dtype))
    r3 = 2 * HID1
    slab_b = slab_b.at[r3:r3 + HID2, 0:action_dim].set(params["wa3"].astype(dtype))
    slab_b = slab_b.at[r3 + HID2:r3 + 2 * HID2,
                       action_dim:action_dim + 1].set(params["wc3"].astype(dtype))
    rb = 2 * HID1 + 2 * HID2
    slab_b = slab_b.at[rb, 0:HID2].set(params["ba2"].astype(dtype))
    slab_b = slab_b.at[rb, HID2:2 * HID2].set(params["bc2"].astype(dtype))
    slab_b = slab_b.at[rb + 8, 0:action_dim].set(params["ba3"].astype(dtype))
    slab_b = slab_b.at[rb + 8, action_dim].set(params["bc3"][0].astype(dtype))
    return slab_a, slab_b


def _reference_forward(state, params):
    """Pure-JAX reference (unfused, matches the PyTorch module exactly)."""
    x = state.astype(jnp.float32)
    h = jnp.tanh(x @ params["wa1"] + params["ba1"])
    h = jnp.tanh(h @ params["wa2"] + params["ba2"])
    mean = jnp.clip(jnp.tanh(h @ params["wa3"] + params["ba3"]), -1.0, 1.0)
    g = jnp.tanh(x @ params["wc1"] + params["bc1"])
    g = jnp.tanh(g @ params["wc2"] + params["bc2"])
    value = g @ params["wc3"] + params["bc3"]
    return mean, value


if __name__ == "__main__":
    key = jax.random.PRNGKey(0)
    k_state, k_params, k_big = jax.random.split(key, 3)

    batch = 2
    state_dim = 16
    action_dim = 4

    params = init_params(k_params, state_dim, action_dim)
    slab_a, slab_b = pack_params(params, state_dim, action_dim)

    # --- small batch (single-block path) ---
    state = jax.random.normal(k_state, (batch, state_dim), dtype=jnp.float32)
    mean, cov_mat, value = actor_critic_forward(state, slab_a, slab_b,
                                                action_dim=action_dim)
    jax.block_until_ready((mean, cov_mat, value))

    ref_mean, ref_value = _reference_forward(state, params)
    assert mean.shape == (batch, action_dim)
    assert value.shape == (batch, 1)
    assert cov_mat.shape == (action_dim, action_dim)
    assert jnp.allclose(mean, ref_mean, atol=1e-5)
    assert jnp.allclose(value, ref_value, atol=1e-5)
    assert jnp.allclose(cov_mat, jnp.diag(jnp.full((action_dim,), 0.5)))

    # --- larger batch (multi-tile "parallel" grid path; exercises padding) ---
    big_b = 2500
    big_state = jax.random.normal(k_big, (big_b, state_dim), dtype=jnp.float32)
    mean2, _, value2 = actor_critic_forward(big_state, slab_a, slab_b,
                                            action_dim=action_dim)
    jax.block_until_ready((mean2, value2))
    ref_mean2, ref_value2 = _reference_forward(big_state, params)
    assert mean2.shape == (big_b, action_dim)
    assert value2.shape == (big_b, 1)
    assert jnp.allclose(mean2, ref_mean2, atol=1e-5)
    assert jnp.allclose(value2, ref_value2, atol=1e-5)

    print("KERNEL_OK")
</pallas_src>

<mosaic_0001>
module attributes {stable_mosaic.version = 11 : i64} {
  func.func @_actor_critic_kernel(%arg0: i32, %arg1: memref<2x16xf32, #tpu.memory_space<vmem>>, %arg2: memref<24x256xf32, #tpu.memory_space<vmem>>, %arg3: memref<400x128xf32, #tpu.memory_space<vmem>>, %arg4: memref<2x8xf32, #tpu.memory_space<vmem>>) attributes {dimension_semantics = [#tpu.dimension_semantics<parallel>], iteration_bounds = array<i64: 1>, scalar_prefetch = 0 : i64, scratch_operands = 0 : i64, tpu.core_type = #tpu.core_type<tc>, window_params = [{transform_indices = @transform_0, window_bounds = array<i64: 2, 16>}, {pipeline_mode = #tpu.pipeline_mode<synchronous>, transform_indices = @transform_1, window_bounds = array<i64: 24, 256>}, {pipeline_mode = #tpu.pipeline_mode<synchronous>, transform_indices = @transform_2, window_bounds = array<i64: 400, 128>}, {transform_indices = @transform_3, window_bounds = array<i64: 2, 8>}]} {
    %c0 = arith.constant 0 : index
    %c0_0 = arith.constant 0 : index
    %0 = vector.load %arg1[%c0, %c0_0] : memref<2x16xf32, #tpu.memory_space<vmem>>, vector<2x16xf32>
    %c0_1 = arith.constant 0 : index
    %c0_2 = arith.constant 0 : index
    %1 = vector.load %arg2[%c0_1, %c0_2] : memref<24x256xf32, #tpu.memory_space<vmem>>, vector<16x256xf32>
    %c16 = arith.constant 16 : index
    %c0_3 = arith.constant 0 : index
    %2 = vector.load %arg2[%c16, %c0_3] : memref<24x256xf32, #tpu.memory_space<vmem>>, vector<1x256xf32>
    %c0_4 = arith.constant 0 : index
    %c0_5 = arith.constant 0 : index
    %3 = vector.load %arg3[%c0_4, %c0_5] : memref<400x128xf32, #tpu.memory_space<vmem>>, vector<256x128xf32>
    %c256 = arith.constant 256 : index
    %c0_6 = arith.constant 0 : index
    %4 = vector.load %arg3[%c256, %c0_6] : memref<400x128xf32, #tpu.memory_space<vmem>>, vector<128x128xf32>
    %c384 = arith.constant 384 : index
    %c0_7 = arith.constant 0 : index
    %5 = vector.load %arg3[%c384, %c0_7] : memref<400x128xf32, #tpu.memory_space<vmem>>, vector<1x128xf32>
    %c392 = arith.constant 392 : index
    %c0_8 = arith.constant 0 : index
    %6 = vector.load %arg3[%c392, %c0_8] : memref<400x128xf32, #tpu.memory_space<vmem>>, vector<1x128xf32>
    %cst = arith.constant dense<0.000000e+00> : vector<2x256xf32>
    %7 = tpu.matmul %0, %1, %cst {dimension_numbers = #tpu.dot_dimension_numbers<[1], [0], [0], [1], [0, 0, 1, 1], [], []>} : vector<2x16xf32>, vector<16x256xf32>, vector<2x256xf32> -> vector<2x256xf32>
    %8 = vector.broadcast %2 : vector<1x256xf32> to vector<2x256xf32>
    %9 = arith.addf %7, %8 : vector<2x256xf32>
    %10 = math.tanh %9 : vector<2x256xf32>
    %cst_9 = arith.constant dense<0.000000e+00> : vector<2x128xf32>
    %11 = tpu.matmul %10, %3, %cst_9 {dimension_numbers = #tpu.dot_dimension_numbers<[1], [0], [0], [1], [0, 0, 1, 1], [], []>} : vector<2x256xf32>, vector<256x128xf32>, vector<2x128xf32> -> vector<2x128xf32>
    %12 = vector.broadcast %5 : vector<1x128xf32> to vector<2x128xf32>
    %13 = arith.addf %11, %12 : vector<2x128xf32>
    %14 = math.tanh %13 : vector<2x128xf32>
    %cst_10 = arith.constant dense<0.000000e+00> : vector<2x128xf32>
    %15 = tpu.matmul %14, %4, %cst_10 {dimension_numbers = #tpu.dot_dimension_numbers<[1], [0], [0], [1], [0, 0, 1, 1], [], []>} : vector<2x128xf32>, vector<128x128xf32>, vector<2x128xf32> -> vector<2x128xf32>
    %16 = vector.broadcast %6 : vector<1x128xf32> to vector<2x128xf32>
    %17 = arith.addf %15, %16 : vector<2x128xf32>
    %18 = vector.extract_strided_slice %17 {offsets = [0, 0], sizes = [2, 8], strides = [1, 1]} : vector<2x128xf32> to vector<2x8xf32>
    %c0_11 = arith.constant 0 : index
    %c0_12 = arith.constant 0 : index
    %19 = vector.load %arg4[%c0_11, %c0_12] : memref<2x8xf32, #tpu.memory_space<vmem>>, vector<2x8xf32>
    tpu.vector_store %arg4[%c0_11, %c0_12], %18 {strides = array<i32>} : memref<2x8xf32, #tpu.memory_space<vmem>>, vector<2x8xf32>,
    return
  }
  func.func @transform_0(%arg0: i32) -> (i32, i32) {
    %c0_i32 = arith.constant 0 : i32
    %c0_i32_0 = arith.constant 0 : i32
    return %arg0, %c0_i32 : i32, i32
  }
  func.func @transform_1(%arg0: i32) -> (i32, i32) {
    %c0_i32 = arith.constant 0 : i32
    %c0_i32_0 = arith.constant 0 : i32
    %c0_i32_1 = arith.constant 0 : i32
    return %c0_i32, %c0_i32_0 : i32, i32
  }
  func.func @transform_2(%arg0: i32) -> (i32, i32) {
    %c0_i32 = arith.constant 0 : i32
    %c0_i32_0 = arith.constant 0 : i32
    %c0_i32_1 = arith.constant 0 : i32
    return %c0_i32, %c0_i32_0 : i32, i32
  }
  func.func @transform_3(%arg0: i32) -> (i32, i32) {
    %c0_i32 = arith.constant 0 : i32
    %c0_i32_0 = arith.constant 0 : i32
    return %arg0, %c0_i32 : i32, i32
  }
}

</mosaic_0001>

<llo_original>
// kernel: actor_critic_forward.1
$region0: #{actor_critic_forward.1}
  #allocation0 [shape = 'u32[]', space=smem, size = 0x4, offset = 0x4, fixed_abs, tag = 'smem constant byte address 0x4 - core index']
  #allocation1 [shape = 'u32[72,128]{1,0:T(1,128)}', space=vmem, size = 0x9000, scoped, tag = 'internal scratch']
  %s0 = inlined_call_operand.hbm [shape: f32[2,16], index: 0, kind: input, shape index: {}]
  %s1 = inlined_call_operand.hbm [shape: f32[24,256], index: 1, kind: input, shape index: {}]
  %s2 = inlined_call_operand.hbm [shape: f32[400,128], index: 2, kind: input, shape index: {}]
  %s3 = inlined_call_operand.vmem [shape: f32[2,8], index: 3, kind: output, shape index: {}]
  %s4 = sld [smem:[#allocation0]]
  $region34: #{actor_critic_forward.1} parent=0
    _
  %s6 = ssub.s32 1, %s4
  %s7 = scalar_select 0, %s6, %s4
  $region1: #{actor_critic_forward.1} parent=0
    #allocation2 [shape = 'u8[1024]{0}', space=vmem, size = 0x400, scoped, tag = 'input window, operand 0, single buffered']
    #allocation3 [shape = 's32[1]{0}', space=sflag, size = 0x4, scoped, tag = 'scoped memory for actor_critic_forward.1']
    #allocation4 [shape = 'u8[24576]{0}', space=vmem, size = 0x6000, scoped, tag = 'input window, operand 1, single buffered']
    #allocation5 [shape = 's32[1]{0}', space=sflag, size = 0x4, scoped, tag = 'scoped memory for actor_critic_forward.1']
    #allocation6 [shape = 'u8[204800]{0}', space=vmem, size = 0x32000, scoped, tag = 'input window, operand 2, single buffered']
    %8 = vsyncpa [#allocation3], 0
    %9 = vsyncpa [#allocation5], 0
    // Predicated region
    $region2: #{actor_critic_forward.1} parent=1 // pred_check
      _
    $region3: #{actor_critic_forward.1} parent=1 // pred_check_branch
      %11 = sbr.rel (0) target = $region5
    $region4: #{actor_critic_forward.1} parent=1 // pred_region
      %13 = vsyncadd [#allocation3], 0
      %s15 = sshll.u32 %s0, 4
      %s16 = int_to_ptr.hbm [resolvable:$true] %s15
      %s17 = sshll.u32 [#allocation2], 4
      %s18 = int_to_ptr.vmem [resolvable:$true] %s17
      %20 = dma.hbm_to_vmem [thread:$0]  %s16, 32, %s18, [#allocation3]
    $region5: #{actor_critic_forward.1} parent=1 // pred_fallthru
      _
    // Predicated region
    $region6: #{actor_critic_forward.1} parent=1 // pred_check
      _
    $region7: #{actor_critic_forward.1} parent=1 // pred_check_branch
      %22 = sbr.rel (0) target = $region9
    $region8: #{actor_critic_forward.1} parent=1 // pred_region
      %24 = vsyncadd [#allocation5], 0
      %s25 = sshll.u32 %s1, 4
      %s26 = int_to_ptr.hbm [resolvable:$true] %s25
      %s27 = sshll.u32 [#allocation4], 4
      %s28 = int_to_ptr.vmem [resolvable:$true] %s27
      %33 = dma.hbm_to_vmem [thread:$0]  %s26, 768, %s28, [#allocation5], 256, 256, 16
    $region9: #{actor_critic_forward.1} parent=1 // pred_fallthru
      _
    // Predicated region
    $region10: #{actor_critic_forward.1} parent=1 // pred_check
      _
    $region11: #{actor_critic_forward.1} parent=1 // pred_check_branch
      %35 = sbr.rel (0) target = $region13
    $region12: #{actor_critic_forward.1} parent=1 // pred_region
      %37 = vsyncadd [#allocation5], 0
      %s38 = sshll.u32 %s2, 4
      %s39 = int_to_ptr.hbm [resolvable:$true] %s38
      %s40 = sshll.u32 [#allocation6], 4
      %s41 = int_to_ptr.vmem [resolvable:$true] %s40
      %46 = dma.hbm_to_vmem [thread:$0]  %s39, 6400, %s41, [#allocation5], 128, 128, 8
    $region13: #{actor_critic_forward.1} parent=1 // pred_fallthru
      _
    // Predicated region
    $region14: #{actor_critic_forward.1} parent=1 // pred_check
      _
    $region15: #{actor_critic_forward.1} parent=1 // pred_check_branch
      %48 = sbr.rel (0) target = $region17
    $region16: #{actor_critic_forward.1} parent=1 // pred_region
      %50 = dma.done [#allocation3], 32
    $region17: #{actor_critic_forward.1} parent=1 // pred_fallthru
      _
    // Predicated region
    $region18: #{actor_critic_forward.1} parent=1 // pred_check
      _
    $region19: #{actor_critic_forward.1} parent=1 // pred_check_branch
      %52 = sbr.rel (0) target = $region21
    $region20: #{actor_critic_forward.1} parent=1 // pred_region
      %54 = dma.done [#allocation5], 768
    $region21: #{actor_critic_forward.1} parent=1 // pred_fallthru
      _
    // Predicated region
    $region22: #{actor_critic_forward.1} parent=1 // pred_check
      _
    $region23: #{actor_critic_forward.1} parent=1 // pred_check_branch
      %56 = sbr.rel (0) target = $region25
    $region24: #{actor_critic_forward.1} parent=1 // pred_region
      %58 = dma.done [#allocation5], 6400
    $region25: #{actor_critic_forward.1} parent=1 // pred_fallthru
      _
    %v59 = vld [vmem:[#allocation2] sm:$0x3]
    %v60 = vld [vmem:[#allocation4] sm:$0xff]
    %v61 = vld [vmem:[#allocation4 + $0x8] sm:$0xff]
    %v62 = vld [vmem:[#allocation4 + $0x10] sm:$0xff]
    %v63 = vld [vmem:[#allocation4 + $0x18] sm:$0xff]
    %s64 = scalar_lea.vmem [#allocation4], 32
    %v65 = vld [vmem:[%s64] ss:$8 sm:$0x3]
    %v66 = vld [vmem:[#allocation6] sm:$0xff]
    %v67 = vld [vmem:[#allocation6 + $0x8] sm:$0xff]
    %v68 = vld [vmem:[#allocation6 + $0x10] sm:$0xff]
    %v69 = vld [vmem:[#allocation6 + $0x18] sm:$0xff]
    %v70 = vld [vmem:[#allocation6 + $0x20] sm:$0xff]
    %v71 = vld [vmem:[#allocation6 + $0x28] sm:$0xff]
    %v72 = vld [vmem:[#allocation6 + $0x30] sm:$0xff]
    %v73 = vld [vmem:[#allocation6 + $0x38] sm:$0xff]
    %v74 = vld [vmem:[#allocation6 + $0x40] sm:$0xff]
    %v75 = vld [vmem:[#allocation6 + $0x48] sm:$0xff]
    %v76 = vld [vmem:[#allocation6 + $0x50] sm:$0xff]
    %v77 = vld [vmem:[#allocation6 + $0x58] sm:$0xff]
    %v78 = vld [vmem:[#allocation6 + $0x60] sm:$0xff]
    %v79 = vld [vmem:[#allocation6 + $0x68] sm:$0xff]
    %v80 = vld [vmem:[#allocation6 + $0x70] sm:$0xff]
    %v81 = vld [vmem:[#allocation6 + $0x78] sm:$0xff]
    %v82 = vld [vmem:[#allocation6 + $0x80] sm:$0xff]
    %v83 = vld [vmem:[#allocation6 + $0x88] sm:$0xff]
    %v84 = vld [vmem:[#allocation6 + $0x90] sm:$0xff]
    %v85 = vld [vmem:[#allocation6 + $0x98] sm:$0xff]
    %v86 = vld [vmem:[#allocation6 + $0xa0] sm:$0xff]
    %v87 = vld [vmem:[#allocation6 + $0xa8] sm:$0xff]
    %v88 = vld [vmem:[#allocation6 + $0xb0] sm:$0xff]
    %v89 = vld [vmem:[#allocation6 + $0xb8] sm:$0xff]
    %v90 = vld [vmem:[#allocation6 + $0xc0] sm:$0xff]
    %v91 = vld [vmem:[#allocation6 + $0xc8] sm:$0xff]
    %v92 = vld [vmem:[#allocation6 + $0xd0] sm:$0xff]
    %v93 = vld [vmem:[#allocation6 + $0xd8] sm:$0xff]
    %v94 = vld [vmem:[#allocation6 + $0xe0] sm:$0xff]
    %v95 = vld [vmem:[#allocation6 + $0xe8] sm:$0xff]
    %v96 = vld [vmem:[#allocation6 + $0xf0] sm:$0xff]
    %v97 = vld [vmem:[#allocation6 + $0xf8] sm:$0xff]
    %v98 = vld [vmem:[#allocation6 + $0x100] sm:$0xff]
    %v99 = vld [vmem:[#allocation6 + $0x108] sm:$0xff]
    %v100 = vld [vmem:[#allocation6 + $0x110] sm:$0xff]
    %v101 = vld [vmem:[#allocation6 + $0x118] sm:$0xff]
    %v102 = vld [vmem:[#allocation6 + $0x120] sm:$0xff]
    %v103 = vld [vmem:[#allocation6 + $0x128] sm:$0xff]
    %v104 = vld [vmem:[#allocation6 + $0x130] sm:$0xff]
    %v105 = vld [vmem:[#allocation6 + $0x138] sm:$0xff]
    %v106 = vld [vmem:[#allocation6 + $0x140] sm:$0xff]
    %v107 = vld [vmem:[#allocation6 + $0x148] sm:$0xff]
    %v108 = vld [vmem:[#allocation6 + $0x150] sm:$0xff]
    %v109 = vld [vmem:[#allocation6 + $0x158] sm:$0xff]
    %v110 = vld [vmem:[#allocation6 + $0x160] sm:$0xff]
    %v111 = vld [vmem:[#allocation6 + $0x168] sm:$0xff]
    %v112 = vld [vmem:[#allocation6 + $0x170] sm:$0xff]
    %v113 = vld [vmem:[#allocation6 + $0x178] sm:$0xff]
    %v114 = vld [vmem:[#allocation6 + $0x180] sm:$0x1]
    %v115 = vld [vmem:[#allocation6 + $0x188] sm:$0x1]
    %v117 = vperm.slane %v65, 0
    %v118 = vperm.slane %v65, 1
    %vm121 = vcmask 130048
    %v123 = vsel %vm121, %v59, 0
    %125 = vmatpush.msra.mxu0 0.0
    %126 = vmatpush.msra.mxu0 0.0
    %127 = vmatpush.msra.mxu0 0.0
    %128 = vmatpush.msra.mxu0 0.0
    %129 = vmatpush.msra.mxu0 0.0
    %130 = vmatpush.msra.mxu0 0.0
    %131 = vmatpush.msra.mxu0 0.0
    %132 = vmatpush.msra.mxu0 0.0
    %133 = vmatpush.msra.mxu0 0.0
    %134 = vmatpush.msra.mxu0 0.0
    %135 = vmatpush.msra.mxu0 0.0
    %136 = vmatpush.msra.mxu0 0.0
    %137 = vmatpush.msra.mxu0 0.0
    %138 = vmatpush.msra.mxu0 0.0
    %139 = vmatpush.msra.mxu0 %v62
    %140 = vmatpush.msra.mxu0 %v60
    %141 = vmatmul.f32.gmra.mxu0 %v123
    %v142 = vpop.f32.mrf.mxu0
    %v143 = vadd.f32 %v117, %v142
    %144 = vdwg.mxu0
    %145 = vmatpush.msra.mxu0 0.0
    %146 = vmatpush.msra.mxu0 0.0
    %147 = vmatpush.msra.mxu0 0.0
    %148 = vmatpush.msra.mxu0 0.0
    %149 = vmatpush.msra.mxu0 0.0
    %150 = vmatpush.msra.mxu0 0.0
    %151 = vmatpush.msra.mxu0 0.0
    %152 = vmatpush.msra.mxu0 0.0
    %153 = vmatpush.msra.mxu0 0.0
    %154 = vmatpush.msra.mxu0 0.0
    %155 = vmatpush.msra.mxu0 0.0
    %156 = vmatpush.msra.mxu0 0.0
    %157 = vmatpush.msra.mxu0 0.0
    %158 = vmatpush.msra.mxu0 0.0
    %159 = vmatpush.msra.mxu0 %v63
    %160 = vmatpush.msra.mxu0 %v61
    %161 = vmatmul.f32.gmra.mxu0 %v123
    %v162 = vpop.f32.mrf.mxu0
    %v163 = vadd.f32 %v118, %v162
    %164 = vdwg.mxu0
    %v165 = vtanh.pop %v143
    %v166 = vtanh.pop %v163
    %v167 = vperm.slane %v114, 0
    %168 = vmatpush.msra.mxu0 %v81
    %169 = vmatpush.msra.mxu0 %v80
    %170 = vmatpush.msra.mxu0 %v79
    %171 = vmatpush.msra.mxu0 %v78
    %172 = vmatpush.msra.mxu0 %v77
    %173 = vmatpush.msra.mxu0 %v76
    %174 = vmatpush.msra.mxu0 %v75
    %175 = vmatpush.msra.mxu0 %v74
    %176 = vmatpush.msra.mxu0 %v73
    %177 = vmatpush.msra.mxu0 %v72
    %178 = vmatpush.msra.mxu0 %v71
    %179 = vmatpush.msra.mxu0 %v70
    %180 = vmatpush.msra.mxu0 %v69
    %181 = vmatpush.msra.mxu0 %v68
    %182 = vmatpush.msra.mxu0 %v67
    %183 = vmatpush.msra.mxu0 %v66
    %184 = vmatmul.f32.gmra.mxu0 %v165
    %v185 = vpop.f32.mrf.mxu0
    %v186 = vadd.f32 %v167, %v185
    %187 = vdwg.mxu0
    %188 = vmatpush.msra.mxu0 %v97
    %189 = vmatpush.msra.mxu0 %v96
    %190 = vmatpush.msra.mxu0 %v95
    %191 = vmatpush.msra.mxu0 %v94
    %192 = vmatpush.msra.mxu0 %v93
    %193 = vmatpush.msra.mxu0 %v92
    %194 = vmatpush.msra.mxu0 %v91
    %195 = vmatpush.msra.mxu0 %v90
    %196 = vmatpush.msra.mxu0 %v89
    %197 = vmatpush.msra.mxu0 %v88
    %198 = vmatpush.msra.mxu0 %v87
    %199 = vmatpush.msra.mxu0 %v86
    %200 = vmatpush.msra.mxu0 %v85
    %201 = vmatpush.msra.mxu0 %v84
    %202 = vmatpush.msra.mxu0 %v83
    %203 = vmatpush.msra.mxu0 %v82
    %204 = vmatmul.f32.gmra.mxu0 %v166
    %v205 = vpop.f32.mrf.mxu0
    %v206 = vadd.f32 %v186, %v205
    %207 = vdwg.mxu0
    %v208 = vtanh.pop %v206
    %v209 = vperm.slane %v115, 0
    %210 = vmatpush.msra.mxu0 %v113
    %211 = vmatpush.msra.mxu0 %v112
    %212 = vmatpush.msra.mxu0 %v111
    %213 = vmatpush.msra.mxu0 %v110
    %214 = vmatpush.msra.mxu0 %v109
    %215 = vmatpush.msra.mxu0 %v108
    %216 = vmatpush.msra.mxu0 %v107
    %217 = vmatpush.msra.mxu0 %v106
    %218 = vmatpush.msra.mxu0 %v105
    %219 = vmatpush.msra.mxu0 %v104
    %220 = vmatpush.msra.mxu0 %v103
    %221 = vmatpush.msra.mxu0 %v102
    %222 = vmatpush.msra.mxu0 %v101
    %223 = vmatpush.msra.mxu0 %v100
    %224 = vmatpush.msra.mxu0 %v99
    %225 = vmatpush.msra.mxu0 %v98
    %226 = vmatmul.f32.gmra.mxu0 %v208
    %v227 = vpop.f32.mrf.mxu0
    %v228 = vadd.f32 %v209, %v227
    %229 = vdwg.mxu0
    %vm230 = vcmask 58368
    %231 = vst.msk [vmem:[%s3] sm:$0x3] %vm230, %v228
    // Predicated region
    $region26: #{actor_critic_forward.1} parent=1 // pred_check
      _
    $region27: #{actor_critic_forward.1} parent=1 // pred_check_branch
      %233 = sbr.rel (0) target = $region29
    $region28: #{actor_critic_forward.1} parent=1 // pred_region
      _
    $region29: #{actor_critic_forward.1} parent=1 // pred_fallthru
      _
    // Predicated region
    $region30: #{actor_critic_forward.1} parent=1 // pred_check
      _
    $region31: #{actor_critic_forward.1} parent=1 // pred_check_branch
      %235 = sbr.rel (0) target = $region33
    $region32: #{actor_critic_forward.1} parent=1 // pred_region
      _
    $region33: #{actor_critic_forward.1} parent=1 // pred_fallthru
      _
    %236 = vsyncpa [#allocation3], 1
    %237 = vsyncpa [#allocation5], 1

</llo_original>
